<compile_context>
chip_gen: v6e
topology: v6e:2x2x1
jax: 0.10.0
libtpu: 0.0.40
codegen_flags: <defaults>
</compile_context>

<pallas_src>
import functools

import jax
import jax.numpy as jnp
from jax.experimental import pallas as pl
from jax.experimental.pallas import tpu as pltpu


def _bn_stats_kernel(x_ref, w_ref, gamma_ref, beta_ref, scale_ref, shift_ref,
                     sum_acc, sq_acc, *, m_total, eps):
    # x_ref:     (ni, TL)  native NCL tile (N squeezed)
    # w_ref:     (nf, ni)  1x1 conv weight
    # gamma_ref: (nf, 1), beta_ref: (nf, 1)
    # scale_ref/shift_ref: (nf, 1) outputs (written on the last grid step)
    # sum_acc/sq_acc: (nf, 1) f32 accumulators (persist across grid steps)
    first = (pl.program_id(0) == 0) & (pl.program_id(1) == 0)
    last = ((pl.program_id(0) == pl.num_programs(0) - 1)
            & (pl.program_id(1) == pl.num_programs(1) - 1))

    @pl.when(first)
    def _():
        sum_acc[...] = jnp.zeros_like(sum_acc)
        sq_acc[...] = jnp.zeros_like(sq_acc)

    # 1x1 conv on this tile: (nf, ni) @ (ni, TL) -> (nf, TL)
    y = jax.lax.dot_general(
        w_ref[...], x_ref[...],
        dimension_numbers=(((1,), (0,)), ((), ())),
        preferred_element_type=jnp.float32,
    )
    sum_acc[...] += jnp.sum(y, axis=1, keepdims=True)
    sq_acc[...] += jnp.sum(y * y, axis=1, keepdims=True)

    @pl.when(last)
    def _():
        inv_m = 1.0 / m_total
        mean = sum_acc[...] * inv_m
        # E[y^2] - mean^2 can go slightly negative in f32 -> clamp.
        var = jnp.maximum(sq_acc[...] * inv_m - mean * mean, 0.0)
        scale = gamma_ref[...] * jax.lax.rsqrt(var + eps)
        scale_ref[...] = scale
        shift_ref[...] = beta_ref[...] - mean * scale


def _shortcut_norm_kernel(x_ref, w_ref, scale_ref, shift_ref, res_ref, o_ref):
    # x_ref:   (ni, TL), res_ref/o_ref: (nf, TL)  -- lane-dense, NCL native
    # scale_ref/shift_ref: (nf, 1) folded BN parameters
    y = jax.lax.dot_general(
        w_ref[...], x_ref[...],
        dimension_numbers=(((1,), (0,)), ((), ())),
        preferred_element_type=jnp.float32,
    )
    z = y * scale_ref[...] + shift_ref[...] + res_ref[...].astype(jnp.float32)
    o_ref[...] = jnp.maximum(z, 0.0).astype(o_ref.dtype)


def _pick_l_tile(L, target=512):
    """Largest multiple of 128 that divides L and is <= target; else full L."""
    t = min(target, L)
    t -= t % 128
    while t >= 128:
        if L % t == 0:
            return t
        t -= 128
    return L


def shortcut1d_forward(inp, out, weight, gamma, beta, eps=1e-5, l_tile=None):
    """inp: (N, ni, L), out: (N, nf, L), weight: (nf, ni) (Conv1d k=1, squeezed)."""
    N, ni, L = inp.shape
    nf = out.shape[1]

    TL = l_tile if l_tile is not None else _pick_l_tile(L)
    assert L % TL == 0 and (TL % 128 == 0 or TL == L), "bad L tile"
    n_l = L // TL
    m_total = float(N * L)

    gamma2 = gamma.reshape(nf, 1).astype(jnp.float32)
    beta2 = beta.reshape(nf, 1).astype(jnp.float32)

    # ---- Pass 1: batch statistics -> folded per-channel (scale, shift). ----
    scale, shift = pl.pallas_call(
        functools.partial(_bn_stats_kernel, m_total=m_total, eps=eps),
        out_shape=(jax.ShapeDtypeStruct((nf, 1), jnp.float32),
                   jax.ShapeDtypeStruct((nf, 1), jnp.float32)),
        grid=(N, n_l),
        in_specs=[
            pl.BlockSpec((pl.Squeezed(), ni, TL), lambda n, l: (n, 0, l)),
            pl.BlockSpec((nf, ni), lambda n, l: (0, 0)),
            pl.BlockSpec((nf, 1), lambda n, l: (0, 0)),
            pl.BlockSpec((nf, 1), lambda n, l: (0, 0)),
        ],
        out_specs=(pl.BlockSpec((nf, 1), lambda n, l: (0, 0)),
                   pl.BlockSpec((nf, 1), lambda n, l: (0, 0))),
        scratch_shapes=[pltpu.VMEM((nf, 1), jnp.float32),
                        pltpu.VMEM((nf, 1), jnp.float32)],
        compiler_params=pltpu.CompilerParams(
            dimension_semantics=("arbitrary", "arbitrary")),
    )(inp, weight, gamma2, beta2)

    # ---- Pass 2: normalize + residual + ReLU, tiles fully independent. ----
    o = pl.pallas_call(
        _shortcut_norm_kernel,
        out_shape=jax.ShapeDtypeStruct((N, nf, L), out.dtype),
        grid=(N, n_l),
        in_specs=[
            pl.BlockSpec((pl.Squeezed(), ni, TL), lambda n, l: (n, 0, l)),
            pl.BlockSpec((nf, ni), lambda n, l: (0, 0)),
            pl.BlockSpec((nf, 1), lambda n, l: (0, 0)),
            pl.BlockSpec((nf, 1), lambda n, l: (0, 0)),
            pl.BlockSpec((pl.Squeezed(), nf, TL), lambda n, l: (n, 0, l)),
        ],
        out_specs=pl.BlockSpec((pl.Squeezed(), nf, TL), lambda n, l: (n, 0, l)),
        compiler_params=pltpu.CompilerParams(
            dimension_semantics=("parallel", "parallel")),
    )(inp, weight, scale, shift, out)
    return o


def shortcut1d_reference(inp, out, weight, gamma, beta, eps=1e-5):
    """Pure-JAX reference of the PyTorch forward (training-mode BN)."""
    y = jnp.einsum("ncl,fc->nfl", inp, weight)            # Conv1d k=1, no bias
    mean = jnp.mean(y, axis=(0, 2), keepdims=True)
    var = jnp.mean((y - mean) ** 2, axis=(0, 2), keepdims=True)
    y_hat = (y - mean) / jnp.sqrt(var + eps)
    z = y_hat * gamma[None, :, None] + beta[None, :, None] + out
    return jnp.maximum(z, 0.0)


if __name__ == "__main__":
    key = jax.random.PRNGKey(0)

    def run_case(N, ni, nf, L, case_key, l_tile=None):
        k_inp, k_out, k_w = jax.random.split(case_key, 3)
        inp = jax.random.normal(k_inp, (N, ni, L), dtype=jnp.float32)
        out = jax.random.normal(k_out, (N, nf, L), dtype=jnp.float32)
        # Conv1d weight (nf, ni, 1) squeezed; BN gamma=1, beta=0 (default init).
        bound = 1.0 / (ni ** 0.5)
        weight = jax.random.uniform(k_w, (nf, ni), dtype=jnp.float32,
                                    minval=-bound, maxval=bound)
        gamma = jnp.ones((nf,), dtype=jnp.float32)
        beta = jnp.zeros((nf,), dtype=jnp.float32)

        got = jax.block_until_ready(
            shortcut1d_forward(inp, out, weight, gamma, beta, l_tile=l_tile))
        ref = shortcut1d_reference(inp, out, weight, gamma, beta)
        assert got.shape == (N, nf, L)
        assert jnp.allclose(got, ref, atol=1e-4, rtol=1e-4), (
            f"mismatch vs JAX reference for shape {(N, ni, nf, L)}")

    k1, k2 = jax.random.split(key)
    # Small shapes consistent with Shortcut1d(ni=4, nf=8): N=2, L=16.
    run_case(2, 4, 8, 16, k1)
    # Larger L to exercise the tiled two-pass BN path (grid = (2, 2)).
    run_case(2, 4, 8, 256, k2, l_tile=128)

    print("KERNEL_OK")
</pallas_src>

<mosaic_0001>
module attributes {stable_mosaic.version = 11 : i64} {
  func.func @_bn_stats_kernel(%arg0: i32, %arg1: i32, %arg2: memref<1x4x16xf32, #tpu.memory_space<vmem>>, %arg3: memref<8x4xf32, #tpu.memory_space<vmem>>, %arg4: memref<8x1xf32, #tpu.memory_space<vmem>>, %arg5: memref<8x1xf32, #tpu.memory_space<vmem>>, %arg6: memref<8x1xf32, #tpu.memory_space<vmem>>, %arg7: memref<8x1xf32, #tpu.memory_space<vmem>>, %arg8: memref<8x1xf32, #tpu.memory_space<vmem>>, %arg9: memref<8x1xf32, #tpu.memory_space<vmem>>) attributes {dimension_semantics = [#tpu.dimension_semantics<arbitrary>, #tpu.dimension_semantics<arbitrary>], iteration_bounds = array<i64: 2, 1>, scalar_prefetch = 0 : i64, scratch_operands = 2 : i64, tpu.core_type = #tpu.core_type<tc>, window_params = [{transform_indices = @transform_0, window_bounds = array<i64: 1, 4, 16>}, {pipeline_mode = #tpu.pipeline_mode<synchronous>, transform_indices = @transform_1, window_bounds = array<i64: 8, 4>}, {pipeline_mode = #tpu.pipeline_mode<synchronous>, transform_indices = @transform_2, window_bounds = array<i64: 8, 1>}, {pipeline_mode = #tpu.pipeline_mode<synchronous>, transform_indices = @transform_3, window_bounds = array<i64: 8, 1>}, {pipeline_mode = #tpu.pipeline_mode<synchronous>, transform_indices = @transform_4, window_bounds = array<i64: 8, 1>}, {pipeline_mode = #tpu.pipeline_mode<synchronous>, transform_indices = @transform_5, window_bounds = array<i64: 8, 1>}]} {
    %c0_i32 = arith.constant 0 : i32
    %0 = arith.cmpi eq, %arg0, %c0_i32 : i32
    %c0_i32_0 = arith.constant 0 : i32
    %1 = arith.cmpi eq, %arg1, %c0_i32_0 : i32
    %2 = arith.andi %0, %1 : i1
    %c1_i32 = arith.constant 1 : i32
    %3 = arith.cmpi eq, %arg0, %c1_i32 : i32
    %c0_i32_1 = arith.constant 0 : i32
    %4 = arith.cmpi eq, %arg1, %c0_i32_1 : i32
    %5 = arith.andi %3, %4 : i1
    %6 = arith.extui %2 : i1 to i32
    %c0_i32_2 = arith.constant 0 : i32
    %7 = arith.cmpi ne, %6, %c0_i32_2 : i32
    scf.if %7 {
      %cst_18 = arith.constant 0.000000e+00 : f32
      %25 = vector.broadcast %cst_18 : f32 to vector<8x1xf32>
      %c0_19 = arith.constant 0 : index
      %c0_20 = arith.constant 0 : index
      %26 = vector.load %arg8[%c0_19, %c0_20] : memref<8x1xf32, #tpu.memory_space<vmem>>, vector<8x1xf32>
      tpu.vector_store %arg8[%c0_19, %c0_20], %25 {strides = array<i32>} : memref<8x1xf32, #tpu.memory_space<vmem>>, vector<8x1xf32>,
      %cst_21 = arith.constant 0.000000e+00 : f32
      %27 = vector.broadcast %cst_21 : f32 to vector<8x1xf32>
      %c0_22 = arith.constant 0 : index
      %c0_23 = arith.constant 0 : index
      %28 = vector.load %arg9[%c0_22, %c0_23] : memref<8x1xf32, #tpu.memory_space<vmem>>, vector<8x1xf32>
      tpu.vector_store %arg9[%c0_22, %c0_23], %27 {strides = array<i32>} : memref<8x1xf32, #tpu.memory_space<vmem>>, vector<8x1xf32>,
    } else {
    }
    %c0 = arith.constant 0 : index
    %c0_3 = arith.constant 0 : index
    %8 = vector.load %arg3[%c0, %c0_3] : memref<8x4xf32, #tpu.memory_space<vmem>>, vector<8x4xf32>
    %c0_4 = arith.constant 0 : index
    %c0_5 = arith.constant 0 : index
    %c0_6 = arith.constant 0 : index
    %9 = vector.load %arg2[%c0_4, %c0_5, %c0_6] : memref<1x4x16xf32, #tpu.memory_space<vmem>>, vector<1x4x16xf32>
    %10 = vector.shape_cast %9 : vector<1x4x16xf32> to vector<4x16xf32>
    %cst = arith.constant dense<0.000000e+00> : vector<8x16xf32>
    %11 = tpu.matmul %8, %10, %cst {dimension_numbers = #tpu.dot_dimension_numbers<[1], [0], [0], [1], [0, 0, 1, 1], [], []>} : vector<8x4xf32>, vector<4x16xf32>, vector<8x16xf32> -> vector<8x16xf32>
    %c0_7 = arith.constant 0 : index
    %c0_8 = arith.constant 0 : index
    %12 = vector.load %arg8[%c0_7, %c0_8] : memref<8x1xf32, #tpu.memory_space<vmem>>, vector<8x1xf32>
    %cst_9 = arith.constant dense<0.000000e+00> : vector<8xf32>
    %13 = vector.multi_reduction <add>, %11, %cst_9 [1] : vector<8x16xf32> to vector<8xf32>
    %14 = vector.shape_cast %13 : vector<8xf32> to vector<8x1xf32>
    %15 = arith.addf %12, %14 : vector<8x1xf32>
    %c0_10 = arith.constant 0 : index
    %c0_11 = arith.constant 0 : index
    %16 = vector.load %arg8[%c0_10, %c0_11] : memref<8x1xf32, #tpu.memory_space<vmem>>, vector<8x1xf32>
    tpu.vector_store %arg8[%c0_10, %c0_11], %15 {strides = array<i32>} : memref<8x1xf32, #tpu.memory_space<vmem>>, vector<8x1xf32>,
    %c0_12 = arith.constant 0 : index
    %c0_13 = arith.constant 0 : index
    %17 = vector.load %arg9[%c0_12, %c0_13] : memref<8x1xf32, #tpu.memory_space<vmem>>, vector<8x1xf32>
    %18 = arith.mulf %11, %11 : vector<8x16xf32>
    %cst_14 = arith.constant dense<0.000000e+00> : vector<8xf32>
    %19 = vector.multi_reduction <add>, %18, %cst_14 [1] : vector<8x16xf32> to vector<8xf32>
    %20 = vector.shape_cast %19 : vector<8xf32> to vector<8x1xf32>
    %21 = arith.addf %17, %20 : vector<8x1xf32>
    %c0_15 = arith.constant 0 : index
    %c0_16 = arith.constant 0 : index
    %22 = vector.load %arg9[%c0_15, %c0_16] : memref<8x1xf32, #tpu.memory_space<vmem>>, vector<8x1xf32>
    tpu.vector_store %arg9[%c0_15, %c0_16], %21 {strides = array<i32>} : memref<8x1xf32, #tpu.memory_space<vmem>>, vector<8x1xf32>,
    %23 = arith.extui %5 : i1 to i32
    %c0_i32_17 = arith.constant 0 : i32
    %24 = arith.cmpi ne, %23, %c0_i32_17 : i32
    scf.if %24 {
      %c0_18 = arith.constant 0 : index
      %c0_19 = arith.constant 0 : index
      %25 = vector.load %arg8[%c0_18, %c0_19] : memref<8x1xf32, #tpu.memory_space<vmem>>, vector<8x1xf32>
      %cst_20 = arith.constant 3.125000e-02 : f32
      %26 = vector.broadcast %cst_20 : f32 to vector<8x1xf32>
      %27 = arith.mulf %25, %26 : vector<8x1xf32>
      %c0_21 = arith.constant 0 : index
      %c0_22 = arith.constant 0 : index
      %28 = vector.load %arg9[%c0_21, %c0_22] : memref<8x1xf32, #tpu.memory_space<vmem>>, vector<8x1xf32>
      %cst_23 = arith.constant 3.125000e-02 : f32
      %29 = vector.broadcast %cst_23 : f32 to vector<8x1xf32>
      %30 = arith.mulf %28, %29 : vector<8x1xf32>
      %31 = arith.mulf %27, %27 : vector<8x1xf32>
      %32 = arith.subf %30, %31 : vector<8x1xf32>
      %cst_24 = arith.constant 0.000000e+00 : f32
      %33 = vector.broadcast %cst_24 : f32 to vector<8x1xf32>
      %34 = arith.maximumf %32, %33 : vector<8x1xf32>
      %c0_25 = arith.constant 0 : index
      %c0_26 = arith.constant 0 : index
      %35 = vector.load %arg4[%c0_25, %c0_26] : memref<8x1xf32, #tpu.memory_space<vmem>>, vector<8x1xf32>
      %cst_27 = arith.constant 9.99999974E-6 : f32
      %36 = vector.broadcast %cst_27 : f32 to vector<8x1xf32>
      %37 = arith.addf %34, %36 : vector<8x1xf32>
      %38 = math.rsqrt %37 : vector<8x1xf32>
      %39 = arith.mulf %35, %38 : vector<8x1xf32>
      %c0_28 = arith.constant 0 : index
      %c0_29 = arith.constant 0 : index
      %40 = vector.load %arg6[%c0_28, %c0_29] : memref<8x1xf32, #tpu.memory_space<vmem>>, vector<8x1xf32>
      tpu.vector_store %arg6[%c0_28, %c0_29], %39 {strides = array<i32>} : memref<8x1xf32, #tpu.memory_space<vmem>>, vector<8x1xf32>,
      %c0_30 = arith.constant 0 : index
      %c0_31 = arith.constant 0 : index
      %41 = vector.load %arg5[%c0_30, %c0_31] : memref<8x1xf32, #tpu.memory_space<vmem>>, vector<8x1xf32>
      %42 = arith.mulf %27, %39 : vector<8x1xf32>
      %43 = arith.subf %41, %42 : vector<8x1xf32>
      %c0_32 = arith.constant 0 : index
      %c0_33 = arith.constant 0 : index
      %44 = vector.load %arg7[%c0_32, %c0_33] : memref<8x1xf32, #tpu.memory_space<vmem>>, vector<8x1xf32>
      tpu.vector_store %arg7[%c0_32, %c0_33], %43 {strides = array<i32>} : memref<8x1xf32, #tpu.memory_space<vmem>>, vector<8x1xf32>,
    } else {
    }
    return
  }
  func.func @transform_0(%arg0: i32, %arg1: i32) -> (i32, i32, i32) {
    %c0_i32 = arith.constant 0 : i32
    %c0_i32_0 = arith.constant 0 : i32
    return %arg0, %c0_i32, %arg1 : i32, i32, i32
  }
  func.func @transform_1(%arg0: i32, %arg1: i32) -> (i32, i32) {
    %c0_i32 = arith.constant 0 : i32
    %c0_i32_0 = arith.constant 0 : i32
    %c0_i32_1 = arith.constant 0 : i32
    return %c0_i32, %c0_i32_0 : i32, i32
  }
  func.func @transform_2(%arg0: i32, %arg1: i32) -> (i32, i32) {
    %c0_i32 = arith.constant 0 : i32
    %c0_i32_0 = arith.constant 0 : i32
    %c0_i32_1 = arith.constant 0 : i32
    return %c0_i32, %c0_i32_0 : i32, i32
  }
  func.func @transform_3(%arg0: i32, %arg1: i32) -> (i32, i32) {
    %c0_i32 = arith.constant 0 : i32
    %c0_i32_0 = arith.constant 0 : i32
    %c0_i32_1 = arith.constant 0 : i32
    return %c0_i32, %c0_i32_0 : i32, i32
  }
  func.func @transform_4(%arg0: i32, %arg1: i32) -> (i32, i32) {
    %c0_i32 = arith.constant 0 : i32
    %c0_i32_0 = arith.constant 0 : i32
    %c0_i32_1 = arith.constant 0 : i32
    return %c0_i32, %c0_i32_0 : i32, i32
  }
  func.func @transform_5(%arg0: i32, %arg1: i32) -> (i32, i32) {
    %c0_i32 = arith.constant 0 : i32
    %c0_i32_0 = arith.constant 0 : i32
    %c0_i32_1 = arith.constant 0 : i32
    return %c0_i32, %c0_i32_0 : i32, i32
  }
}

</mosaic_0001>

<llo_original>
// kernel: tpu_custom_call.1
$region0: #{tpu_custom_call.1}
  #allocation0 [shape = 'u32[]', space=smem, size = 0x4, offset = 0x4, fixed_abs, tag = 'smem constant byte address 0x4 - core index']
  #allocation1 [shape = 'u32[144,128]{1,0:T(1,128)}', space=vmem, size = 0x12000, scoped, tag = 'internal scratch']
  #allocation2 [shape = 'f32[8,1]{1,0:T(8,128)}', space=vmem, size = 0x1000, scoped, tag = 'scratch operand']
  #allocation3 [shape = 'f32[8,1]{1,0:T(8,128)}', space=vmem, size = 0x1000, scoped, tag = 'scratch operand']
  %s0 = inlined_call_operand.vmem [shape: f32[2,4,16], index: 0, kind: input, shape index: {}]
  %s1 = inlined_call_operand.vmem [shape: f32[8,4], index: 1, kind: input, shape index: {}]
  %s2 = inlined_call_operand.vmem [shape: f32[8,1], index: 2, kind: input, shape index: {}]
  %s3 = inlined_call_operand.vmem [shape: f32[8,1], index: 3, kind: input, shape index: {}]
  %s4 = inlined_call_operand.vmem [shape: f32[8,1], index: 4, kind: output, shape index: {0}]
  %s5 = inlined_call_operand.vmem [shape: f32[8,1], index: 5, kind: output, shape index: {1}]
  %6 = xla_tuple %s4, %s5
  %s7 = sld [smem:[#allocation0]]
  $region65: #{tpu_custom_call.1} parent=0
    _
  %s9 = ssub.s32 1, %s7
  %s10 = scalar_select 0, %s9, %s7
  loop: start=0, step=1, limit=4
  $region2: #{tpu_custom_call.1} parent=0 // loop_pre_header
    _
  $region3: #{tpu_custom_call.1} parent=0 // loop_header
    %s12 = sphi 0, %s16
    %p13 = scmp.ge.s32.totalorder %s12, 4
    %s19 = sphi 0, %s31
    %s20 = sphi 0, %s27
    %s21 = sphi 0, %s19
    %s22 = sphi 0, %s20
    %s23 = sphi 0, %s21
    %s24 = sphi 0, %s22
    %s36 = sphi 0, %s38
    %s39 = sphi 0, %s36
    %s40 = sphi 0, %s39
    %s56 = sphi 0, %s40
    %s60 = sphi 0, %s60
    %s62 = sphi 0, %s60
    %s63 = sphi 0, %s62
    %s77 = sphi 0, %s63
    %s81 = sphi 0, %s81
    %s83 = sphi 0, %s81
    %s84 = sphi 0, %s83
    %s98 = sphi 0, %s84
    %s102 = sphi 0, %s102
    %s104 = sphi 0, %s102
    %s105 = sphi 0, %s104
    %s119 = sphi 0, %s105
    %s123 = sphi 0, %s123
    %s125 = sphi 0, %s123
    %s126 = sphi 0, %s125
    %s140 = sphi 0, %s126
    %s144 = sphi 0, %s144
    %s146 = sphi 0, %s144
    %s147 = sphi 0, %s146
    %s161 = sphi 0, %s147
  $region4: #{tpu_custom_call.1} parent=0 // loop_header_branch
    %15 = sbr.rel (%p13) target = $region8
  $region5: #{tpu_custom_call.1} parent=0 // loop_body
    %s17 = ssub.s32 %s12, 1
    %s18 = ssub.s32 %s12, 2
    %s25 = sadd.s32 1, %s20
    %p26 = scmp.ge.s32.totalorder %s25, 1
    %s27 = scalar_select %p26, 0, %s25
    %s28 = sadd.s32 1, %s19
    %s29 = scalar_select %p26, %s28, %s19
    %p30 = scmp.ge.s32.totalorder %s29, 2
    %s31 = scalar_select %p30, 0, %s29
    %s32 = ssub.s32 %s19, %s31
    %s33 = ssub.s32 %s20, %s27
    %s34 = sor.u32 %s32, %s33
    %p35 = scmp.eq.s32.totalorder %s34, 0
    %s37 = sadd.s32 %s36, 1
    %s38 = scalar_select %p35, %s36, %s37
    %p41 = pneg %p35
    %p42 = scmp.eq.s32.totalorder %s12, 1
    %p43 = por %p41, %p42
    %p44 = scmp.ne.s32.totalorder %s36, %s39
    %p45 = scmp.eq.s32.totalorder %s12, 0
    %p46 = por %p44, %p45
    %p47 = scmp.ne.s32.totalorder %s36, %s39
    %p48 = scmp.eq.s32.totalorder %s17, 1
    %p49 = por %p47, %p48
    %p50 = scmp.ne.s32.totalorder %s39, %s40
    %p51 = scmp.eq.s32.totalorder %s17, 0
    %p52 = por %p50, %p51
    %p53 = scmp.ne.s32.totalorder %s39, %s40
    %p54 = scmp.eq.s32.totalorder %s18, 1
    %p55 = por %p53, %p54
    %p57 = scmp.ne.s32.totalorder %s40, %s56
    %p58 = scmp.eq.s32.totalorder %s18, 0
    %p59 = por %p57, %p58
    %s61 = sadd.s32 %s60, 1
    %p64 = scmp.eq.s32.totalorder %s12, 1
    %p65 = scmp.ne.s32.totalorder %s60, %s62
    %p66 = scmp.eq.s32.totalorder %s12, 0
    %p67 = por %p65, %p66
    %p68 = scmp.ne.s32.totalorder %s60, %s62
    %p69 = scmp.eq.s32.totalorder %s17, 1
    %p70 = por %p68, %p69
    %p71 = scmp.ne.s32.totalorder %s62, %s63
    %p72 = scmp.eq.s32.totalorder %s17, 0
    %p73 = por %p71, %p72
    %p74 = scmp.ne.s32.totalorder %s62, %s63
    %p75 = scmp.eq.s32.totalorder %s18, 1
    %p76 = por %p74, %p75
    %p78 = scmp.ne.s32.totalorder %s63, %s77
    %p79 = scmp.eq.s32.totalorder %s18, 0
    %p80 = por %p78, %p79
    %s82 = sadd.s32 %s81, 1
    %p85 = scmp.eq.s32.totalorder %s12, 1
    %p86 = scmp.ne.s32.totalorder %s81, %s83
    %p87 = scmp.eq.s32.totalorder %s12, 0
    %p88 = por %p86, %p87
    %p89 = scmp.ne.s32.totalorder %s81, %s83
    %p90 = scmp.eq.s32.totalorder %s17, 1
    %p91 = por %p89, %p90
    %p92 = scmp.ne.s32.totalorder %s83, %s84
    %p93 = scmp.eq.s32.totalorder %s17, 0
    %p94 = por %p92, %p93
    %p95 = scmp.ne.s32.totalorder %s83, %s84
    %p96 = scmp.eq.s32.totalorder %s18, 1
    %p97 = por %p95, %p96
    %p99 = scmp.ne.s32.totalorder %s84, %s98
    %p100 = scmp.eq.s32.totalorder %s18, 0
    %p101 = por %p99, %p100
    %s103 = sadd.s32 %s102, 1
    %p106 = scmp.eq.s32.totalorder %s12, 1
    %p107 = scmp.ne.s32.totalorder %s102, %s104
    %p108 = scmp.eq.s32.totalorder %s12, 0
    %p109 = por %p107, %p108
    %p110 = scmp.ne.s32.totalorder %s102, %s104
    %p111 = scmp.eq.s32.totalorder %s17, 1
    %p112 = por %p110, %p111
    %p113 = scmp.ne.s32.totalorder %s104, %s105
    %p114 = scmp.eq.s32.totalorder %s17, 0
    %p115 = por %p113, %p114
    %p116 = scmp.ne.s32.totalorder %s104, %s105
    %p117 = scmp.eq.s32.totalorder %s18, 1
    %p118 = por %p116, %p117
    %p120 = scmp.ne.s32.totalorder %s105, %s119
    %p121 = scmp.eq.s32.totalorder %s18, 0
    %p122 = por %p120, %p121
    %s124 = sadd.s32 %s123, 1
    %p127 = scmp.eq.s32.totalorder %s12, 1
    %p128 = scmp.ne.s32.totalorder %s123, %s125
    %p129 = scmp.eq.s32.totalorder %s12, 0
    %p130 = por %p128, %p129
    %p131 = scmp.ne.s32.totalorder %s123, %s125
    %p132 = scmp.eq.s32.totalorder %s17, 1
    %p133 = por %p131, %p132
    %p134 = scmp.ne.s32.totalorder %s125, %s126
    %p135 = scmp.eq.s32.totalorder %s17, 0
    %p136 = por %p134, %p135
    %p137 = scmp.ne.s32.totalorder %s125, %s126
    %p138 = scmp.eq.s32.totalorder %s18, 1
    %p139 = por %p137, %p138
    %p141 = scmp.ne.s32.totalorder %s126, %s140
    %p142 = scmp.eq.s32.totalorder %s18, 0
    %p143 = por %p141, %p142
    %s145 = sadd.s32 %s144, 1
    %p148 = scmp.eq.s32.totalorder %s12, 1
    %p149 = scmp.ne.s32.totalorder %s144, %s146
    %p150 = scmp.eq.s32.totalorder %s12, 0
    %p151 = por %p149, %p150
    %p152 = scmp.ne.s32.totalorder %s144, %s146
    %p153 = scmp.eq.s32.totalorder %s17, 1
    %p154 = por %p152, %p153
    %p155 = scmp.ne.s32.totalorder %s146, %s147
    %p156 = scmp.eq.s32.totalorder %s17, 0
    %p157 = por %p155, %p156
    %p158 = scmp.ne.s32.totalorder %s146, %s147
    %p159 = scmp.eq.s32.totalorder %s18, 1
    %p160 = por %p158, %p159
    %p162 = scmp.ne.s32.totalorder %s147, %s161
    %p163 = scmp.eq.s32.totalorder %s18, 0
    %p164 = por %p162, %p163
    %p165 = scmp.le.s32.totalorder 1, %s12
    %p166 = scmp.lt.s32.totalorder %s12, 3
    %p167 = pnand %p165, %p166
    %p168 = pneg %p167
    // Predicated region
    $region9: #{tpu_custom_call.1} parent=5 // pred_check
      _
    $region10: #{tpu_custom_call.1} parent=5 // pred_check_branch
      %170 = sbr.rel (%p167) target = $region12
    $region11: #{tpu_custom_call.1} parent=5 // pred_region
      %s171 = ssub.s32 %s12, 1
      // Predicated region
      $region13: #{tpu_custom_call.1} parent=11 // pred_check
        %p172 = pneg %p73
      $region14: #{tpu_custom_call.1} parent=11 // pred_check_branch
        %174 = sbr.rel (%p172) target = $region16
      $region15: #{tpu_custom_call.1} parent=11 // pred_region
        _
      $region16: #{tpu_custom_call.1} parent=11 // pred_fallthru
        _
      // Predicated region
      $region17: #{tpu_custom_call.1} parent=11 // pred_check
        %p175 = pneg %p94
      $region18: #{tpu_custom_call.1} parent=11 // pred_check_branch
        %177 = sbr.rel (%p175) target = $region20
      $region19: #{tpu_custom_call.1} parent=11 // pred_region
        _
      $region20: #{tpu_custom_call.1} parent=11 // pred_fallthru
        _
      // Predicated region
      $region21: #{tpu_custom_call.1} parent=11 // pred_check
        %p178 = pneg %p115
      $region22: #{tpu_custom_call.1} parent=11 // pred_check_branch
        %180 = sbr.rel (%p178) target = $region24
      $region23: #{tpu_custom_call.1} parent=11 // pred_region
        _
      $region24: #{tpu_custom_call.1} parent=11 // pred_fallthru
        _
    $region12: #{tpu_custom_call.1} parent=5 // pred_fallthru
      _
    %p181 = scmp.lt.s32.totalorder %s12, 2
    // Predicated region
    $region25: #{tpu_custom_call.1} parent=5 // pred_check
      %p182 = pneg %p181
    $region26: #{tpu_custom_call.1} parent=5 // pred_check_branch
      %184 = sbr.rel (%p182) target = $region28
    $region27: #{tpu_custom_call.1} parent=5 // pred_region
      // Predicated region
      $region29: #{tpu_custom_call.1} parent=27 // pred_check
        %p185 = pneg %p46
      $region30: #{tpu_custom_call.1} parent=27 // pred_check_branch
        %187 = sbr.rel (%p185) target = $region32
      $region31: #{tpu_custom_call.1} parent=27 // pred_region
        %p188 = scmp.lt.s32.totalorder %s19, 1
        %s189 = scalar_select %p188, %s19, 1
        %p190 = scmp.lt.s32.totalorder %s20, 0
        %s191 = scalar_select %p190, %s20, 0
        %s192 = sadd.s32 %s191, %s189
        %s193 = smul.addr %s192, 4
        %s194 = scalar_lea.vmem %s0, %s193
      $region32: #{tpu_custom_call.1} parent=27 // pred_fallthru
        _
    $region28: #{tpu_custom_call.1} parent=5 // pred_fallthru
      _
    %p195 = scmp.le.s32.totalorder 1, %s12
    %p196 = scmp.lt.s32.totalorder %s12, 3
    %p197 = pnand %p195, %p196
    %p198 = pneg %p197
    // Predicated region
    $region33: #{tpu_custom_call.1} parent=5 // pred_check
      _
    $region34: #{tpu_custom_call.1} parent=5 // pred_check_branch
      %200 = sbr.rel (%p197) target = $region36
    $region35: #{tpu_custom_call.1} parent=5 // pred_region
      %s201 = ssub.s32 %s12, 1
      %p202 = scmp.lt.s32.totalorder %s21, 1
      %s203 = scalar_select %p202, %s21, 1
      %p204 = scmp.lt.s32.totalorder %s22, 0
      %s205 = scalar_select %p204, %s22, 0
      %s206 = sadd.s32 %s205, %s203
      %s207 = smul.addr %s206, 4
      %s208 = scalar_lea.vmem %s0, %s207
      %p209 = pneg %p52
      %p210 = pneg %p49
      %p211 = pneg %p73
      %p212 = pneg %p70
      %p213 = pneg %p94
      %p214 = pneg %p91
      %p215 = pneg %p115
      %p216 = pneg %p112
      %p217 = pneg %p136
      %p218 = pneg %p133
      %p219 = pneg %p157
      %p220 = pneg %p154
      %p221 = scmp.lt.s32.totalorder %s21, 1
      %s222 = scalar_select %p221, %s21, 1
      %p223 = scmp.lt.s32.totalorder %s22, 0
      %s224 = scalar_select %p223, %s22, 0
      %s225 = sadd.s32 %s224, %s222
      %s226 = smul.addr %s225, 4
      %s227 = scalar_lea.vmem %s0, %s226
      %p228 = scmp.eq.s32.totalorder %s21, 0
      %p229 = scmp.eq.s32.totalorder %s22, 0
      %p230 = pnand %p228, %p229
      %p231 = pneg %p230
      %p232 = scmp.eq.s32.totalorder %s21, 1
      %p233 = pnand %p232, %p229
      %p234 = pneg %p233
      // Predicated region
      $region37: #{tpu_custom_call.1} parent=35 // pred_check
        _
      $region38: #{tpu_custom_call.1} parent=35 // pred_check_branch
        %236 = sbr.rel (%p230) target = $region40
      $region39: #{tpu_custom_call.1} parent=35 // pred_region
        %vm237 = vcmask 7168
        %238 = vst.msk [vmem:[#allocation2] sm:$0xff] %vm237, 0.0
        %239 = vst.msk [vmem:[#allocation3] sm:$0xff] %vm237, 0.0
      $region40: #{tpu_custom_call.1} parent=35 // pred_fallthru
        _
      %v240 = vld [vmem:[%s1] sm:$0xff]
      %v241 = vld [vmem:[%s227] sm:$0xf]
      %vm242 = vcmask 31744
      %v244 = vsel %vm242, %v240, 0
      %vm246 = vcmask 1043456
      %v248 = vsel %vm246, %v241, 0
      %250 = vmatprep.subr.mxu0 0.0
      %251 = vmatpush1.msra.mxu0 0.0
      %252 = vmatprep.subr.mxu0 0.0
      %253 = vmatpush1.msra.mxu0 0.0
      %254 = vmatprep.subr.mxu0 0.0
      %255 = vmatpush1.msra.mxu0 0.0
      %256 = vmatprep.subr.mxu0 0.0
      %257 = vmatpush1.msra.mxu0 0.0
      %258 = vmatprep.subr.mxu0 0.0
      %259 = vmatpush1.msra.mxu0 0.0
      %260 = vmatprep.subr.mxu0 0.0
      %261 = vmatpush1.msra.mxu0 0.0
      %262 = vmatprep.subr.mxu0 0.0
      %263 = vmatpush1.msra.mxu0 0.0
      %264 = vmatprep.subr.mxu0 0.0
      %265 = vmatpush1.msra.mxu0 0.0
      %266 = vmatprep.subr.mxu0 0.0
      %267 = vmatpush1.msra.mxu0 0.0
      %268 = vmatprep.subr.mxu0 0.0
      %269 = vmatpush1.msra.mxu0 0.0
      %270 = vmatprep.subr.mxu0 0.0
      %271 = vmatpush1.msra.mxu0 0.0
      %272 = vmatprep.subr.mxu0 0.0
      %273 = vmatpush1.msra.mxu0 0.0
      %274 = vmatprep.subr.mxu0 0.0
      %275 = vmatpush1.msra.mxu0 0.0
      %276 = vmatprep.subr.mxu0 0.0
      %277 = vmatpush1.msra.mxu0 0.0
      %278 = vmatprep.subr.mxu0 0.0
      %279 = vmatpush1.msra.mxu0 0.0
      %280 = vmatprep.subr.mxu0 0.0
      %281 = vmatpush1.msra.mxu0 %v248
      %282 = vmatprep.subr.mxu0 0.0
      %283 = vmatpush2.msra.mxu0 0.0
      %284 = vmatprep.subr.mxu0 0.0
      %285 = vmatpush2.msra.mxu0 0.0
      %286 = vmatprep.subr.mxu0 0.0
      %287 = vmatpush2.msra.mxu0 0.0
      %288 = vmatprep.subr.mxu0 0.0
      %289 = vmatpush2.msra.mxu0 0.0
      %290 = vmatprep.subr.mxu0 0.0
      %291 = vmatpush2.msra.mxu0 0.0
      %292 = vmatprep.subr.mxu0 0.0
      %293 = vmatpush2.msra.mxu0 0.0
      %294 = vmatprep.subr.mxu0 0.0
      %295 = vmatpush2.msra.mxu0 0.0
      %296 = vmatprep.subr.mxu0 0.0
      %297 = vmatpush2.msra.mxu0 0.0
      %298 = vmatprep.subr.mxu0 0.0
      %299 = vmatpush2.msra.mxu0 0.0
      %300 = vmatprep.subr.mxu0 0.0
      %301 = vmatpush2.msra.mxu0 0.0
      %302 = vmatprep.subr.mxu0 0.0
      %303 = vmatpush2.msra.mxu0 0.0
      %304 = vmatprep.subr.mxu0 0.0
      %305 = vmatpush2.msra.mxu0 0.0
      %306 = vmatprep.subr.mxu0 0.0
      %307 = vmatpush2.msra.mxu0 0.0
      %308 = vmatprep.subr.mxu0 0.0
      %309 = vmatpush2.msra.mxu0 0.0
      %310 = vmatprep.subr.mxu0 0.0
      %311 = vmatpush2.msra.mxu0 0.0
      %312 = vmatprep.subr.mxu0 0.0
      %313 = vmatpush2.msra.mxu0 0.0
      %314 = vmatprep.mubr.f32.mxu0 0.0
      %315 = vmatmul.mubr.f32.gmra.mxu0 %v244
      %v316 = vpop.f32.mrf.mxu0
      %v317 = vadd.f32 0.0, %v316
      %v318 = vpop.f32.mrf.mxu0
      %319 = vdwg.mxu0
      %v320 = vld [vmem:[#allocation2] sm:$0xff]
      %vm321 = vcmask 130048
      %v322 = vsel %vm321, %v317, 0.0
      %323 = vadd.xlane.f32.xlu0 %v322
      %v324 = vpop.xlane.xlu0 %323
      %v325 = vadd.f32 %v320, %v324
      %vm326 = vcmask 7168
      %327 = vst.msk [vmem:[#allocation2] sm:$0xff] %vm326, %v325
      %v328 = vld [vmem:[#allocation3] sm:$0xff]
      %v329 = vmul.f32 %v317, %v317
      %v330 = vsel %vm321, %v329, 0.0
      %331 = vadd.xlane.f32.xlu0 %v330
      %v332 = vpop.xlane.xlu0 %331
      %v333 = vadd.f32 %v328, %v332
      %334 = vst.msk [vmem:[#allocation3] sm:$0xff] %vm326, %v333
      // Predicated region
      $region41: #{tpu_custom_call.1} parent=35 // pred_check
        _
      $region42: #{tpu_custom_call.1} parent=35 // pred_check_branch
        %336 = sbr.rel (%p233) target = $region44
      $region43: #{tpu_custom_call.1} parent=35 // pred_region
        %v337 = vld [vmem:[#allocation2] sm:$0xff]
        %v338 = vmul.f32 %v337, 0.03125
        %v339 = vld [vmem:[#allocation3] sm:$0xff]
        %v340 = vmul.f32 %v339, 0.03125
        %v341 = vmul.f32 %v338, %v338
        %v342 = vsub.f32 %v340, %v341
        %v343 = vmax.f32 %v342, 0.0
        %v344 = vld [vmem:[%s2] sm:$0xff]
        %v345 = vadd.f32 %v343, 1e-05
        %v346 = vrsqrt.pop %v345
        %v347 = vmul.f32 %v344, %v346
        %348 = vst.msk [vmem:[%s4] sm:$0xff] %vm326, %v347
        %v349 = vld [vmem:[%s3] sm:$0xff]
        %v350 = vmul.f32 %v338, %v347
        %v351 = vsub.f32 %v349, %v350
        %352 = vst.msk [vmem:[%s5] sm:$0xff] %vm326, %v351
      $region44: #{tpu_custom_call.1} parent=35 // pred_fallthru
        _
      // Predicated region
      $region45: #{tpu_custom_call.1} parent=35 // pred_check
        %p353 = pneg %p133
      $region46: #{tpu_custom_call.1} parent=35 // pred_check_branch
        %355 = sbr.rel (%p353) target = $region48
      $region47: #{tpu_custom_call.1} parent=35 // pred_region
        _
      $region48: #{tpu_custom_call.1} parent=35 // pred_fallthru
        _
      // Predicated region
      $region49: #{tpu_custom_call.1} parent=35 // pred_check
        %p356 = pneg %p154
      $region50: #{tpu_custom_call.1} parent=35 // pred_check_branch
        %358 = sbr.rel (%p356) target = $region52
      $region51: #{tpu_custom_call.1} parent=35 // pred_region
        _
      $region52: #{tpu_custom_call.1} parent=35 // pred_fallthru
        _
      // Predicated region
      $region53: #{tpu_custom_call.1} parent=35 // pred_check
        %p359 = pneg %p133
      $region54: #{tpu_custom_call.1} parent=35 // pred_check_branch
        %361 = sbr.rel (%p359) target = $region56
      $region55: #{tpu_custom_call.1} parent=35 // pred_region
        _
      $region56: #{tpu_custom_call.1} parent=35 // pred_fallthru
        _
      // Predicated region
      $region57: #{tpu_custom_call.1} parent=35 // pred_check
        %p362 = pneg %p154
      $region58: #{tpu_custom_call.1} parent=35 // pred_check_branch
        %364 = sbr.rel (%p362) target = $region60
      $region59: #{tpu_custom_call.1} parent=35 // pred_region
        _
      $region60: #{tpu_custom_call.1} parent=35 // pred_fallthru
        _
    $region36: #{tpu_custom_call.1} parent=5 // pred_fallthru
      _
    %p365 = scmp.le.s32.totalorder 2, %s12
    // Predicated region
    $region61: #{tpu_custom_call.1} parent=5 // pred_check
      %p366 = pneg %p365
    $region62: #{tpu_custom_call.1} parent=5 // pred_check_branch
      %368 = sbr.rel (%p366) target = $region64
    $region63: #{tpu_custom_call.1} parent=5 // pred_region
      %s369 = ssub.s32 %s12, 2
    $region64: #{tpu_custom_call.1} parent=5 // pred_fallthru
      _
  $region6: #{tpu_custom_call.1} parent=0 // loop_footer
    %s16 = sadd.s32 1, %s12
  $region7: #{tpu_custom_call.1} parent=0 // loop_footer_branch
    %11 = sbr.rel target = $region3
  $region8: #{tpu_custom_call.1} parent=0 // loop_exit
    _

</llo_original>
